<compile_context>
chip_gen: v5e
topology: v5e:2x2
jax: 0.10.0
libtpu: 0.0.40
codegen_flags: <defaults>
</compile_context>

<pallas_src>
import math

import jax
import jax.numpy as jnp
from jax.experimental import pallas as pl
from jax.experimental.pallas import tpu as pltpu

_LANE = 128
_ROW_GRAN = 16  # batch-tile granularity (covers bf16 sublane packing; also a multiple of 8)


def _discriminator_kernel(x_ref,
                          w1_ref, b1_ref,
                          w2_ref, b2_ref,
                          w3_ref, b3_ref,
                          w4_ref, b4_ref,
                          o_ref):
    """Whole forward pass on one batch tile, entirely in VMEM.

    x_ref:  (TB, D_in)               (compute dtype, e.g. bf16)
    wK_ref: (D_{k-1}, D_k)           (compute dtype)
    bK_ref: (1, D_k)                 (f32)
    o_ref:  (TB, D_out_padded)       (f32, lane-dense)
    """

    def leaky_relu(v):  # f32 elementwise on the VPU
        return jnp.where(v > 0, v, 0.4 * v)

    mxu_dtype = w1_ref.dtype

    h = jnp.dot(x_ref[...], w1_ref[...],
                preferred_element_type=jnp.float32) + b1_ref[...]
    h = leaky_relu(h)

    h = jnp.dot(h.astype(mxu_dtype), w2_ref[...],
                preferred_element_type=jnp.float32) + b2_ref[...]
    h = leaky_relu(h)

    h = jnp.dot(h.astype(mxu_dtype), w3_ref[...],
                preferred_element_type=jnp.float32) + b3_ref[...]
    h = leaky_relu(h)

    z = jnp.dot(h.astype(mxu_dtype), w4_ref[...],
                preferred_element_type=jnp.float32) + b4_ref[...]
    o_ref[...] = jax.nn.sigmoid(z).astype(o_ref.dtype)


def _round_up(v, m):
    return ((v + m - 1) // m) * m


def discriminator_forward(x, params, *, batch_tile=512, compute_dtype=jnp.bfloat16):
    """params = ((w1, b1), (w2, b2), (w3, b3), (w4, b4)) with wK: [in, out], bK: [out].

    batch_tile: rows per grid step (clamped/rounded; 512 saturates the HBM roofline,
                stays well inside v7x's 64 MiB VMEM, and keeps >=2 steps at realistic batch).
    compute_dtype: dtype fed to the MXU (bf16 halves the x HBM stream; accumulation is f32).
    """
    B, D_in = x.shape
    (w1, b1), (w2, b2), (w3, b3), (w4, b4) = params
    d1, d2, d3, d_out = w1.shape[1], w2.shape[1], w3.shape[1], w4.shape[1]

    # --- Lane-dense output: zero-pad last layer's columns to a multiple of 128 lanes. ---
    d_out_p = _round_up(d_out, _LANE)
    w4p = jnp.zeros((d3, d_out_p), w4.dtype).at[:, :d_out].set(w4)
    b4p = jnp.zeros((d_out_p,), b4.dtype).at[:d_out].set(b4)

    # --- Batch tiling: round tile to the row granularity, pad the batch to a multiple. ---
    tile = min(batch_tile, _round_up(B, _ROW_GRAN))
    tile = _round_up(tile, _ROW_GRAN)
    B_p = _round_up(B, tile)
    if B_p != B:
        x = jnp.pad(x, ((0, B_p - B), (0, 0)))

    # --- dtype plumbing: bf16 (or f32) feeds to the MXU; biases stay f32 rows. ---
    x_c = x.astype(compute_dtype)
    w1c, w2c, w3c, w4c = (w.astype(compute_dtype) for w in (w1, w2, w3, w4p))
    b1r, b2r, b3r, b4r = (b.reshape(1, -1).astype(jnp.float32)
                          for b in (b1, b2, b3, b4p))

    full = lambda shape: pl.BlockSpec(shape, lambda i: (0, 0))  # resident operands

    grid = (B_p // tile,)
    out = pl.pallas_call(
        _discriminator_kernel,
        out_shape=jax.ShapeDtypeStruct((B_p, d_out_p), jnp.float32),
        grid_spec=pltpu.PrefetchScalarGridSpec(
            num_scalar_prefetch=0,
            grid=grid,
            in_specs=[
                pl.BlockSpec((tile, D_in), lambda i: (i, 0)),   # x tile (streamed)
                full((D_in, d1)),    full((1, d1)),
                full((d1, d2)),      full((1, d2)),
                full((d2, d3)),      full((1, d3)),
                full((d3, d_out_p)), full((1, d_out_p)),
            ],
            out_specs=pl.BlockSpec((tile, d_out_p), lambda i: (i, 0)),
        ),
        compiler_params=pltpu.CompilerParams(
            dimension_semantics=("parallel",),
            vmem_limit_bytes=64 << 20,
        ),
    )(x_c, w1c, b1r, w2c, b2r, w3c, b3r, w4c, b4r)

    return out[:B, :d_out]


def xavier_uniform(key, fan_in, fan_out, dtype=jnp.float32):
    # Matches torch.nn.init.xavier_uniform_ bound; returned as [in, out] layout.
    bound = math.sqrt(6.0 / (fan_in + fan_out))
    return jax.random.uniform(key, (fan_in, fan_out), dtype=dtype,
                              minval=-bound, maxval=bound)


def init_discriminator_params(key, input_size, hidden_size, output_size):
    dims = [input_size, hidden_size[0], hidden_size[1], hidden_size[2], output_size]
    keys = jax.random.split(key, 4)
    params = []
    for k, (din, dout) in zip(keys, zip(dims[:-1], dims[1:])):
        w = xavier_uniform(k, din, dout)
        b = jnp.zeros((dout,), jnp.float32)  # nn.init.constant_(bias, 0.0)
        params.append((w, b))
    return tuple(params)


def reference_forward(x, params):
    """Pure-JAX f32 reference for correctness check."""
    h = x
    for i, (w, b) in enumerate(params):
        h = h @ w + b
        if i < 3:
            h = jnp.where(h > 0, h, 0.4 * h)
        else:
            h = jax.nn.sigmoid(h)
    return h


if __name__ == "__main__":
    key = jax.random.PRNGKey(0)
    k_param, k_x = jax.random.split(key)

    # Small shapes consistent with the module: Discriminator(input_size, hidden_size(3), output_size)
    input_size = 32
    hidden_size = [64, 64, 32]
    output_size = 8
    batch = 16

    params = init_discriminator_params(k_param, input_size, hidden_size, output_size)
    x = jax.random.normal(k_x, (batch, input_size), dtype=jnp.float32)

    ref = reference_forward(x, params)

    # f32 feed: exact-path check against the reference.
    out_f32 = discriminator_forward(x, params, compute_dtype=jnp.float32)
    out_f32 = jax.block_until_ready(out_f32)
    assert out_f32.shape == (batch, output_size)
    assert jnp.allclose(out_f32, ref, atol=1e-5, rtol=1e-5), "f32 kernel mismatch vs reference"

    # bf16 MXU feed (default, perf path): loosened tolerance.
    out_bf16 = discriminator_forward(x, params)  # compute_dtype=bf16, batch_tile=512 -> 1 step here
    out_bf16 = jax.block_until_ready(out_bf16)
    assert out_bf16.shape == (batch, output_size)
    assert jnp.allclose(out_bf16, ref, atol=2e-2, rtol=2e-2), "bf16 kernel mismatch vs reference"

    print("KERNEL_OK")
</pallas_src>

<mosaic_0001>
module attributes {stable_mosaic.version = 11 : i64} {
  func.func @_discriminator_kernel(%arg0: i32, %arg1: memref<16x32xf32, #tpu.memory_space<vmem>>, %arg2: memref<32x64xf32, #tpu.memory_space<vmem>>, %arg3: memref<1x64xf32, #tpu.memory_space<vmem>>, %arg4: memref<64x64xf32, #tpu.memory_space<vmem>>, %arg5: memref<1x64xf32, #tpu.memory_space<vmem>>, %arg6: memref<64x32xf32, #tpu.memory_space<vmem>>, %arg7: memref<1x32xf32, #tpu.memory_space<vmem>>, %arg8: memref<32x128xf32, #tpu.memory_space<vmem>>, %arg9: memref<1x128xf32, #tpu.memory_space<vmem>>, %arg10: memref<16x128xf32, #tpu.memory_space<vmem>>) attributes {dimension_semantics = [#tpu.dimension_semantics<parallel>], iteration_bounds = array<i64: 1>, scalar_prefetch = 0 : i64, scratch_operands = 0 : i64, tpu.core_type = #tpu.core_type<tc>, window_params = [{transform_indices = @transform_0, window_bounds = array<i64: 16, 32>}, {pipeline_mode = #tpu.pipeline_mode<synchronous>, transform_indices = @transform_1, window_bounds = array<i64: 32, 64>}, {pipeline_mode = #tpu.pipeline_mode<synchronous>, transform_indices = @transform_2, window_bounds = array<i64: 1, 64>}, {pipeline_mode = #tpu.pipeline_mode<synchronous>, transform_indices = @transform_3, window_bounds = array<i64: 64, 64>}, {pipeline_mode = #tpu.pipeline_mode<synchronous>, transform_indices = @transform_4, window_bounds = array<i64: 1, 64>}, {pipeline_mode = #tpu.pipeline_mode<synchronous>, transform_indices = @transform_5, window_bounds = array<i64: 64, 32>}, {pipeline_mode = #tpu.pipeline_mode<synchronous>, transform_indices = @transform_6, window_bounds = array<i64: 1, 32>}, {pipeline_mode = #tpu.pipeline_mode<synchronous>, transform_indices = @transform_7, window_bounds = array<i64: 32, 128>}, {pipeline_mode = #tpu.pipeline_mode<synchronous>, transform_indices = @transform_8, window_bounds = array<i64: 1, 128>}, {transform_indices = @transform_9, window_bounds = array<i64: 16, 128>}]} {
    %c0 = arith.constant 0 : index
    %c0_0 = arith.constant 0 : index
    %0 = vector.load %arg1[%c0, %c0_0] : memref<16x32xf32, #tpu.memory_space<vmem>>, vector<16x32xf32>
    %c0_1 = arith.constant 0 : index
    %c0_2 = arith.constant 0 : index
    %1 = vector.load %arg2[%c0_1, %c0_2] : memref<32x64xf32, #tpu.memory_space<vmem>>, vector<32x64xf32>
    %cst = arith.constant dense<0.000000e+00> : vector<16x64xf32>
    %2 = tpu.matmul %0, %1, %cst {dimension_numbers = #tpu.dot_dimension_numbers<[1], [0], [0], [1], [0, 0, 1, 1], [], []>} : vector<16x32xf32>, vector<32x64xf32>, vector<16x64xf32> -> vector<16x64xf32>
    %c0_3 = arith.constant 0 : index
    %c0_4 = arith.constant 0 : index
    %3 = vector.load %arg3[%c0_3, %c0_4] : memref<1x64xf32, #tpu.memory_space<vmem>>, vector<1x64xf32>
    %4 = vector.broadcast %3 : vector<1x64xf32> to vector<16x64xf32>
    %5 = arith.addf %2, %4 : vector<16x64xf32>
    %cst_5 = arith.constant 0.000000e+00 : f32
    %6 = vector.broadcast %cst_5 : f32 to vector<16x64xf32>
    %7 = arith.cmpf ogt, %5, %6 : vector<16x64xf32>
    %cst_6 = arith.constant 4.000000e-01 : f32
    %8 = vector.broadcast %cst_6 : f32 to vector<16x64xf32>
    %9 = arith.mulf %8, %5 : vector<16x64xf32>
    %10 = arith.select %7, %5, %9 : vector<16x64xi1>, vector<16x64xf32>
    %c0_7 = arith.constant 0 : index
    %c0_8 = arith.constant 0 : index
    %11 = vector.load %arg4[%c0_7, %c0_8] : memref<64x64xf32, #tpu.memory_space<vmem>>, vector<64x64xf32>
    %cst_9 = arith.constant dense<0.000000e+00> : vector<16x64xf32>
    %12 = tpu.matmul %10, %11, %cst_9 {dimension_numbers = #tpu.dot_dimension_numbers<[1], [0], [0], [1], [0, 0, 1, 1], [], []>} : vector<16x64xf32>, vector<64x64xf32>, vector<16x64xf32> -> vector<16x64xf32>
    %c0_10 = arith.constant 0 : index
    %c0_11 = arith.constant 0 : index
    %13 = vector.load %arg5[%c0_10, %c0_11] : memref<1x64xf32, #tpu.memory_space<vmem>>, vector<1x64xf32>
    %14 = vector.broadcast %13 : vector<1x64xf32> to vector<16x64xf32>
    %15 = arith.addf %12, %14 : vector<16x64xf32>
    %cst_12 = arith.constant 0.000000e+00 : f32
    %16 = vector.broadcast %cst_12 : f32 to vector<16x64xf32>
    %17 = arith.cmpf ogt, %15, %16 : vector<16x64xf32>
    %cst_13 = arith.constant 4.000000e-01 : f32
    %18 = vector.broadcast %cst_13 : f32 to vector<16x64xf32>
    %19 = arith.mulf %18, %15 : vector<16x64xf32>
    %20 = arith.select %17, %15, %19 : vector<16x64xi1>, vector<16x64xf32>
    %c0_14 = arith.constant 0 : index
    %c0_15 = arith.constant 0 : index
    %21 = vector.load %arg6[%c0_14, %c0_15] : memref<64x32xf32, #tpu.memory_space<vmem>>, vector<64x32xf32>
    %cst_16 = arith.constant dense<0.000000e+00> : vector<16x32xf32>
    %22 = tpu.matmul %20, %21, %cst_16 {dimension_numbers = #tpu.dot_dimension_numbers<[1], [0], [0], [1], [0, 0, 1, 1], [], []>} : vector<16x64xf32>, vector<64x32xf32>, vector<16x32xf32> -> vector<16x32xf32>
    %c0_17 = arith.constant 0 : index
    %c0_18 = arith.constant 0 : index
    %23 = vector.load %arg7[%c0_17, %c0_18] : memref<1x32xf32, #tpu.memory_space<vmem>>, vector<1x32xf32>
    %24 = vector.broadcast %23 : vector<1x32xf32> to vector<16x32xf32>
    %25 = arith.addf %22, %24 : vector<16x32xf32>
    %cst_19 = arith.constant 0.000000e+00 : f32
    %26 = vector.broadcast %cst_19 : f32 to vector<16x32xf32>
    %27 = arith.cmpf ogt, %25, %26 : vector<16x32xf32>
    %cst_20 = arith.constant 4.000000e-01 : f32
    %28 = vector.broadcast %cst_20 : f32 to vector<16x32xf32>
    %29 = arith.mulf %28, %25 : vector<16x32xf32>
    %30 = arith.select %27, %25, %29 : vector<16x32xi1>, vector<16x32xf32>
    %c0_21 = arith.constant 0 : index
    %c0_22 = arith.constant 0 : index
    %31 = vector.load %arg8[%c0_21, %c0_22] : memref<32x128xf32, #tpu.memory_space<vmem>>, vector<32x128xf32>
    %cst_23 = arith.constant dense<0.000000e+00> : vector<16x128xf32>
    %32 = tpu.matmul %30, %31, %cst_23 {dimension_numbers = #tpu.dot_dimension_numbers<[1], [0], [0], [1], [0, 0, 1, 1], [], []>} : vector<16x32xf32>, vector<32x128xf32>, vector<16x128xf32> -> vector<16x128xf32>
    %c0_24 = arith.constant 0 : index
    %c0_25 = arith.constant 0 : index
    %33 = vector.load %arg9[%c0_24, %c0_25] : memref<1x128xf32, #tpu.memory_space<vmem>>, vector<1x128xf32>
    %34 = vector.broadcast %33 : vector<1x128xf32> to vector<16x128xf32>
    %35 = arith.addf %32, %34 : vector<16x128xf32>
    %36 = arith.negf %35 : vector<16x128xf32>
    %37 = math.exp %36 : vector<16x128xf32>
    %cst_26 = arith.constant 1.000000e+00 : f32
    %38 = vector.broadcast %cst_26 : f32 to vector<16x128xf32>
    %39 = arith.addf %38, %37 : vector<16x128xf32>
    %40 = arith.divf %38, %39 : vector<16x128xf32>
    %c0_27 = arith.constant 0 : index
    %c0_28 = arith.constant 0 : index
    %41 = vector.load %arg10[%c0_27, %c0_28] : memref<16x128xf32, #tpu.memory_space<vmem>>, vector<16x128xf32>
    tpu.vector_store %arg10[%c0_27, %c0_28], %40 {strides = array<i32>} : memref<16x128xf32, #tpu.memory_space<vmem>>, vector<16x128xf32>,
    return
  }
  func.func @transform_0(%arg0: i32) -> (i32, i32) {
    %c0_i32 = arith.constant 0 : i32
    %c0_i32_0 = arith.constant 0 : i32
    return %arg0, %c0_i32 : i32, i32
  }
  func.func @transform_1(%arg0: i32) -> (i32, i32) {
    %c0_i32 = arith.constant 0 : i32
    %c0_i32_0 = arith.constant 0 : i32
    %c0_i32_1 = arith.constant 0 : i32
    return %c0_i32, %c0_i32_0 : i32, i32
  }
  func.func @transform_2(%arg0: i32) -> (i32, i32) {
    %c0_i32 = arith.constant 0 : i32
    %c0_i32_0 = arith.constant 0 : i32
    %c0_i32_1 = arith.constant 0 : i32
    return %c0_i32, %c0_i32_0 : i32, i32
  }
  func.func @transform_3(%arg0: i32) -> (i32, i32) {
    %c0_i32 = arith.constant 0 : i32
    %c0_i32_0 = arith.constant 0 : i32
    %c0_i32_1 = arith.constant 0 : i32
    return %c0_i32, %c0_i32_0 : i32, i32
  }
  func.func @transform_4(%arg0: i32) -> (i32, i32) {
    %c0_i32 = arith.constant 0 : i32
    %c0_i32_0 = arith.constant 0 : i32
    %c0_i32_1 = arith.constant 0 : i32
    return %c0_i32, %c0_i32_0 : i32, i32
  }
  func.func @transform_5(%arg0: i32) -> (i32, i32) {
    %c0_i32 = arith.constant 0 : i32
    %c0_i32_0 = arith.constant 0 : i32
    %c0_i32_1 = arith.constant 0 : i32
    return %c0_i32, %c0_i32_0 : i32, i32
  }
  func.func @transform_6(%arg0: i32) -> (i32, i32) {
    %c0_i32 = arith.constant 0 : i32
    %c0_i32_0 = arith.constant 0 : i32
    %c0_i32_1 = arith.constant 0 : i32
    return %c0_i32, %c0_i32_0 : i32, i32
  }
  func.func @transform_7(%arg0: i32) -> (i32, i32) {
    %c0_i32 = arith.constant 0 : i32
    %c0_i32_0 = arith.constant 0 : i32
    %c0_i32_1 = arith.constant 0 : i32
    return %c0_i32, %c0_i32_0 : i32, i32
  }
  func.func @transform_8(%arg0: i32) -> (i32, i32) {
    %c0_i32 = arith.constant 0 : i32
    %c0_i32_0 = arith.constant 0 : i32
    %c0_i32_1 = arith.constant 0 : i32
    return %c0_i32, %c0_i32_0 : i32, i32
  }
  func.func @transform_9(%arg0: i32) -> (i32, i32) {
    %c0_i32 = arith.constant 0 : i32
    %c0_i32_0 = arith.constant 0 : i32
    return %arg0, %c0_i32 : i32, i32
  }
}

</mosaic_0001>

<llo_original>
// kernel: tpu_custom_call.1
$region0: #{tpu_custom_call.1}
  #allocation0 [shape = 'u32[]', space=smem, size = 0x4, offset = 0x4, fixed_abs, tag = 'smem constant byte address 0x4 - core index']
  #allocation1 [shape = 'u32[72,128]{1,0:T(1,128)}', space=vmem, size = 0x9000, scoped, tag = 'internal scratch']
  %s0 = inlined_call_operand.hbm [shape: f32[16,32], index: 0, kind: input, shape index: {}]
  %s1 = inlined_call_operand.vmem [shape: f32[32,64], index: 1, kind: input, shape index: {}]
  %s2 = inlined_call_operand.vmem [shape: f32[1,64], index: 2, kind: input, shape index: {}]
  %s3 = inlined_call_operand.vmem [shape: f32[64,64], index: 3, kind: input, shape index: {}]
  %s4 = inlined_call_operand.vmem [shape: f32[1,64], index: 4, kind: input, shape index: {}]
  %s5 = inlined_call_operand.vmem [shape: f32[64,32], index: 5, kind: input, shape index: {}]
  %s6 = inlined_call_operand.vmem [shape: f32[1,32], index: 6, kind: input, shape index: {}]
  %s7 = inlined_call_operand.hbm [shape: f32[32,128], index: 7, kind: input, shape index: {}]
  %s8 = inlined_call_operand.vmem [shape: f32[1,128], index: 8, kind: input, shape index: {}]
  %s9 = inlined_call_operand.hbm [shape: f32[16,128], index: 9, kind: output, shape index: {}]
  %s10 = sld [smem:[#allocation0]]
  $region54: #{tpu_custom_call.1} parent=0
    _
  %s12 = ssub.s32 1, %s10
  %s13 = scalar_select 0, %s12, %s10
  $region1: #{tpu_custom_call.1} parent=0
    #allocation2 [shape = 'u8[8192]{0}', space=vmem, size = 0x2000, scoped, tag = 'input window, operand 0, single buffered']
    #allocation3 [shape = 's32[1]{0}', space=sflag, size = 0x4, scoped, tag = 'scoped memory for tpu_custom_call.1']
    #allocation4 [shape = 's32[1]{0}', space=sflag, size = 0x4, scoped, tag = 'scoped memory for tpu_custom_call.1']
    #allocation5 [shape = 'u8[16384]{0}', space=vmem, size = 0x4000, scoped, tag = 'input window, operand 7, single buffered']
    #allocation6 [shape = 's32[1]{0}', space=sflag, size = 0x4, scoped, tag = 'scoped memory for tpu_custom_call.1']
    #allocation7 [shape = 'u8[8192]{0}', space=vmem, size = 0x2000, scoped, tag = 'output window, operand 0, single buffered']
    %14 = vsyncpa [#allocation3], 0
    %15 = vsyncpa [#allocation6], 0
    %16 = vsyncpa [#allocation4], 0
    // Predicated region
    $region2: #{tpu_custom_call.1} parent=1 // pred_check
      _
    $region3: #{tpu_custom_call.1} parent=1 // pred_check_branch
      %18 = sbr.rel (0) target = $region5
    $region4: #{tpu_custom_call.1} parent=1 // pred_region
      %20 = vsyncadd [#allocation3], 0
      %s21 = sshll.u32 %s0, 4
      %s22 = int_to_ptr.hbm [resolvable:$true] %s21
      %s23 = sshll.u32 [#allocation2], 4
      %s24 = int_to_ptr.vmem [resolvable:$true] %s23
      %29 = dma.hbm_to_vmem [thread:$0]  %s22, 256, %s24, [#allocation3], 128, 128, 8
    $region5: #{tpu_custom_call.1} parent=1 // pred_fallthru
      _
    // Predicated region
    $region6: #{tpu_custom_call.1} parent=1 // pred_check
      _
    $region7: #{tpu_custom_call.1} parent=1 // pred_check_branch
      %31 = sbr.rel (0) target = $region9
    $region8: #{tpu_custom_call.1} parent=1 // pred_region
      _
    $region9: #{tpu_custom_call.1} parent=1 // pred_fallthru
      _
    // Predicated region
    $region10: #{tpu_custom_call.1} parent=1 // pred_check
      _
    $region11: #{tpu_custom_call.1} parent=1 // pred_check_branch
      %33 = sbr.rel (0) target = $region13
    $region12: #{tpu_custom_call.1} parent=1 // pred_region
      _
    $region13: #{tpu_custom_call.1} parent=1 // pred_fallthru
      _
    // Predicated region
    $region14: #{tpu_custom_call.1} parent=1 // pred_check
      _
    $region15: #{tpu_custom_call.1} parent=1 // pred_check_branch
      %35 = sbr.rel (0) target = $region17
    $region16: #{tpu_custom_call.1} parent=1 // pred_region
      _
    $region17: #{tpu_custom_call.1} parent=1 // pred_fallthru
      _
    // Predicated region
    $region18: #{tpu_custom_call.1} parent=1 // pred_check
      _
    $region19: #{tpu_custom_call.1} parent=1 // pred_check_branch
      %37 = sbr.rel (0) target = $region21
    $region20: #{tpu_custom_call.1} parent=1 // pred_region
      _
    $region21: #{tpu_custom_call.1} parent=1 // pred_fallthru
      _
    // Predicated region
    $region22: #{tpu_custom_call.1} parent=1 // pred_check
      _
    $region23: #{tpu_custom_call.1} parent=1 // pred_check_branch
      %39 = sbr.rel (0) target = $region25
    $region24: #{tpu_custom_call.1} parent=1 // pred_region
      _
    $region25: #{tpu_custom_call.1} parent=1 // pred_fallthru
      _
    // Predicated region
    $region26: #{tpu_custom_call.1} parent=1 // pred_check
      _
    $region27: #{tpu_custom_call.1} parent=1 // pred_check_branch
      %41 = sbr.rel (0) target = $region29
    $region28: #{tpu_custom_call.1} parent=1 // pred_region
      _
    $region29: #{tpu_custom_call.1} parent=1 // pred_fallthru
      _
    // Predicated region
    $region30: #{tpu_custom_call.1} parent=1 // pred_check
      _
    $region31: #{tpu_custom_call.1} parent=1 // pred_check_branch
      %43 = sbr.rel (0) target = $region33
    $region32: #{tpu_custom_call.1} parent=1 // pred_region
      %45 = vsyncadd [#allocation6], 0
      %s46 = sshll.u32 %s7, 4
      %s47 = int_to_ptr.hbm [resolvable:$true] %s46
      %s48 = sshll.u32 [#allocation5], 4
      %s49 = int_to_ptr.vmem [resolvable:$true] %s48
      %54 = dma.hbm_to_vmem [thread:$0]  %s47, 512, %s49, [#allocation6], 128, 128, 8
    $region33: #{tpu_custom_call.1} parent=1 // pred_fallthru
      _
    // Predicated region
    $region34: #{tpu_custom_call.1} parent=1 // pred_check
      _
    $region35: #{tpu_custom_call.1} parent=1 // pred_check_branch
      %56 = sbr.rel (0) target = $region37
    $region36: #{tpu_custom_call.1} parent=1 // pred_region
      _
    $region37: #{tpu_custom_call.1} parent=1 // pred_fallthru
      _
    // Predicated region
    $region38: #{tpu_custom_call.1} parent=1 // pred_check
      _
    $region39: #{tpu_custom_call.1} parent=1 // pred_check_branch
      %58 = sbr.rel (0) target = $region41
    $region40: #{tpu_custom_call.1} parent=1 // pred_region
      %60 = dma.done [#allocation3], 256
    $region41: #{tpu_custom_call.1} parent=1 // pred_fallthru
      _
    // Predicated region
    $region42: #{tpu_custom_call.1} parent=1 // pred_check
      _
    $region43: #{tpu_custom_call.1} parent=1 // pred_check_branch
      %62 = sbr.rel (0) target = $region45
    $region44: #{tpu_custom_call.1} parent=1 // pred_region
      %64 = dma.done [#allocation6], 512
    $region45: #{tpu_custom_call.1} parent=1 // pred_fallthru
      _
    %v65 = vld [vmem:[#allocation2] sm:$0xff]
    %v66 = vld [vmem:[#allocation2 + $0x8] sm:$0xff]
    %v67 = vld [vmem:[%s1] sm:$0xff]
    %v68 = vld [vmem:[%s1 + $0x8] sm:$0xff]
    %v69 = vld [vmem:[%s1 + $0x10] sm:$0xff]
    %v70 = vld [vmem:[%s1 + $0x18] sm:$0xff]
    %v71 = vld [vmem:[%s2] sm:$0x1]
    %v73 = vperm.slane %v71, 0
    %vm75 = vcmask 261120
    %v77 = vsel %vm75, %v65, 0
    %v80 = vsel %vm75, %v66, 0
    %82 = vmatpush.msra.mxu0 0.0
    %83 = vmatpush.msra.mxu0 0.0
    %84 = vmatpush.msra.mxu0 0.0
    %85 = vmatpush.msra.mxu0 0.0
    %86 = vmatpush.msra.mxu0 0.0
    %87 = vmatpush.msra.mxu0 0.0
    %88 = vmatpush.msra.mxu0 0.0
    %89 = vmatpush.msra.mxu0 0.0
    %90 = vmatpush.msra.mxu0 0.0
    %91 = vmatpush.msra.mxu0 0.0
    %92 = vmatpush.msra.mxu0 0.0
    %93 = vmatpush.msra.mxu0 0.0
    %94 = vmatpush.msra.mxu0 %v70
    %95 = vmatpush.msra.mxu0 %v69
    %96 = vmatpush.msra.mxu0 %v68
    %97 = vmatpush.msra.mxu0 %v67
    %98 = vmatmul.f32.gmra.mxu0 %v77
    %v99 = vpop.f32.mrf.mxu0
    %v100 = vadd.f32 %v73, %v99
    %101 = vmatmul.f32.gmra.mxu0 %v80
    %v102 = vpop.f32.mrf.mxu0
    %v103 = vadd.f32 %v73, %v102
    %104 = vdwg.mxu0
    %vm105 = vcmp.gt.f32.partialorder %v100, 0.0
    %vm106 = vcmp.gt.f32.partialorder %v103, 0.0
    %v107 = vmul.f32 %v100, 0.4
    %v108 = vmul.f32 %v103, 0.4
    %v109 = vsel %vm105, %v100, %v107
    %v110 = vsel %vm106, %v103, %v108
    %v111 = vld [vmem:[%s3] sm:$0xff]
    %v112 = vld [vmem:[%s3 + $0x8] sm:$0xff]
    %v113 = vld [vmem:[%s3 + $0x10] sm:$0xff]
    %v114 = vld [vmem:[%s3 + $0x18] sm:$0xff]
    %v115 = vld [vmem:[%s3 + $0x20] sm:$0xff]
    %v116 = vld [vmem:[%s3 + $0x28] sm:$0xff]
    %v117 = vld [vmem:[%s3 + $0x30] sm:$0xff]
    %v118 = vld [vmem:[%s3 + $0x38] sm:$0xff]
    %v119 = vld [vmem:[%s4] sm:$0x1]
    %v121 = vperm.slane %v119, 0
    %vm123 = vcmask 523264
    %v125 = vsel %vm123, %v109, 0
    %v128 = vsel %vm123, %v110, 0
    %130 = vmatpush.msra.mxu0 0.0
    %131 = vmatpush.msra.mxu0 0.0
    %132 = vmatpush.msra.mxu0 0.0
    %133 = vmatpush.msra.mxu0 0.0
    %134 = vmatpush.msra.mxu0 0.0
    %135 = vmatpush.msra.mxu0 0.0
    %136 = vmatpush.msra.mxu0 0.0
    %137 = vmatpush.msra.mxu0 0.0
    %138 = vmatpush.msra.mxu0 %v118
    %139 = vmatpush.msra.mxu0 %v117
    %140 = vmatpush.msra.mxu0 %v116
    %141 = vmatpush.msra.mxu0 %v115
    %142 = vmatpush.msra.mxu0 %v114
    %143 = vmatpush.msra.mxu0 %v113
    %144 = vmatpush.msra.mxu0 %v112
    %145 = vmatpush.msra.mxu0 %v111
    %146 = vmatmul.f32.gmra.mxu0 %v125
    %v147 = vpop.f32.mrf.mxu0
    %v148 = vadd.f32 %v121, %v147
    %149 = vmatmul.f32.gmra.mxu0 %v128
    %v150 = vpop.f32.mrf.mxu0
    %v151 = vadd.f32 %v121, %v150
    %152 = vdwg.mxu0
    %vm153 = vcmp.gt.f32.partialorder %v148, 0.0
    %vm154 = vcmp.gt.f32.partialorder %v151, 0.0
    %v155 = vmul.f32 %v148, 0.4
    %v156 = vmul.f32 %v151, 0.4
    %v157 = vsel %vm153, %v148, %v155
    %v158 = vsel %vm154, %v151, %v156
    %v159 = vld [vmem:[%s5] sm:$0xff]
    %v160 = vld [vmem:[%s5 + $0x8] sm:$0xff]
    %v161 = vld [vmem:[%s5 + $0x10] sm:$0xff]
    %v162 = vld [vmem:[%s5 + $0x18] sm:$0xff]
    %v163 = vld [vmem:[%s5 + $0x20] sm:$0xff]
    %v164 = vld [vmem:[%s5 + $0x28] sm:$0xff]
    %v165 = vld [vmem:[%s5 + $0x30] sm:$0xff]
    %v166 = vld [vmem:[%s5 + $0x38] sm:$0xff]
    %v167 = vld [vmem:[%s6] sm:$0x1]
    %v169 = vperm.slane %v167, 0
    %v172 = vsel %vm123, %v157, 0
    %v175 = vsel %vm123, %v158, 0
    %177 = vmatpush.msra.mxu0 0.0
    %178 = vmatpush.msra.mxu0 0.0
    %179 = vmatpush.msra.mxu0 0.0
    %180 = vmatpush.msra.mxu0 0.0
    %181 = vmatpush.msra.mxu0 0.0
    %182 = vmatpush.msra.mxu0 0.0
    %183 = vmatpush.msra.mxu0 0.0
    %184 = vmatpush.msra.mxu0 0.0
    %185 = vmatpush.msra.mxu0 %v166
    %186 = vmatpush.msra.mxu0 %v165
    %187 = vmatpush.msra.mxu0 %v164
    %188 = vmatpush.msra.mxu0 %v163
    %189 = vmatpush.msra.mxu0 %v162
    %190 = vmatpush.msra.mxu0 %v161
    %191 = vmatpush.msra.mxu0 %v160
    %192 = vmatpush.msra.mxu0 %v159
    %193 = vmatmul.f32.gmra.mxu0 %v172
    %v194 = vpop.f32.mrf.mxu0
    %v195 = vadd.f32 %v169, %v194
    %196 = vmatmul.f32.gmra.mxu0 %v175
    %v197 = vpop.f32.mrf.mxu0
    %v198 = vadd.f32 %v169, %v197
    %199 = vdwg.mxu0
    %vm200 = vcmp.gt.f32.partialorder %v195, 0.0
    %vm201 = vcmp.gt.f32.partialorder %v198, 0.0
    %v202 = vmul.f32 %v195, 0.4
    %v203 = vmul.f32 %v198, 0.4
    %v204 = vsel %vm200, %v195, %v202
    %v205 = vsel %vm201, %v198, %v203
    %v206 = vld [vmem:[#allocation5] sm:$0xff]
    %v207 = vld [vmem:[#allocation5 + $0x8] sm:$0xff]
    %v208 = vld [vmem:[#allocation5 + $0x10] sm:$0xff]
    %v209 = vld [vmem:[#allocation5 + $0x18] sm:$0xff]
    %v210 = vld [vmem:[%s8] sm:$0x1]
    %v212 = vperm.slane %v210, 0
    %v215 = vsel %vm75, %v204, 0
    %v218 = vsel %vm75, %v205, 0
    %220 = vmatpush.msra.mxu0 0.0
    %221 = vmatpush.msra.mxu0 0.0
    %222 = vmatpush.msra.mxu0 0.0
    %223 = vmatpush.msra.mxu0 0.0
    %224 = vmatpush.msra.mxu0 0.0
    %225 = vmatpush.msra.mxu0 0.0
    %226 = vmatpush.msra.mxu0 0.0
    %227 = vmatpush.msra.mxu0 0.0
    %228 = vmatpush.msra.mxu0 0.0
    %229 = vmatpush.msra.mxu0 0.0
    %230 = vmatpush.msra.mxu0 0.0
    %231 = vmatpush.msra.mxu0 0.0
    %232 = vmatpush.msra.mxu0 %v209
    %233 = vmatpush.msra.mxu0 %v208
    %234 = vmatpush.msra.mxu0 %v207
    %235 = vmatpush.msra.mxu0 %v206
    %236 = vmatmul.f32.gmra.mxu0 %v215
    %v237 = vpop.f32.mrf.mxu0
    %v238 = vadd.f32 %v212, %v237
    %239 = vmatmul.f32.gmra.mxu0 %v218
    %v240 = vpop.f32.mrf.mxu0
    %v241 = vadd.f32 %v212, %v240
    %242 = vdwg.mxu0
    %v243 = vxor.u32 %v238, 2147483648
    %v244 = vxor.u32 %v241, 2147483648
    %v245 = vmul.f32 %v243, 1.442695
    %v246 = vpow.pop %v245
    %v247 = vmul.f32 %v244, 1.442695
    %v248 = vpow.pop %v247
    %v249 = vadd.f32 %v246, 1.0
    %v250 = vadd.f32 %v248, 1.0
    %v251 = vrcp.pop %v249
    %v252 = vmul.f32 %v249, %v251
    %v253 = vsub.f32 1.0, %v252
    %v254 = vmul.f32 %v251, %v253
    %v255 = vadd.f32 %v251, %v254
    %vm256 = vweird.f32 %v249
    %vm257 = vweird.f32 %v251
    %vm258 = vmor %vm256, %vm257
    %v259 = vsel %vm258, %v251, %v255
    %v260 = vand.u32 2147483647, %v249
    %vm261 = vcmp.eq.f32.partialorder %v260, 8.507059e+37
    %v262 = vand.u32 %v249, 2147483648
    %v263 = vor.u32 1.1754944e-38, %v262
    %v264 = vsel %vm261, %v263, %v259
    %v265 = vmul.f32 1.0, %v264
    %v266 = vrcp.pop %v250
    %v267 = vmul.f32 %v250, %v266
    %v268 = vsub.f32 1.0, %v267
    %v269 = vmul.f32 %v266, %v268
    %v270 = vadd.f32 %v266, %v269
    %vm271 = vweird.f32 %v250
    %vm272 = vweird.f32 %v266
    %vm273 = vmor %vm271, %vm272
    %v274 = vsel %vm273, %v266, %v270
    %v275 = vand.u32 2147483647, %v250
    %vm276 = vcmp.eq.f32.partialorder %v275, 8.507059e+37
    %v277 = vand.u32 %v250, 2147483648
    %v278 = vor.u32 1.1754944e-38, %v277
    %v279 = vsel %vm276, %v278, %v274
    %v280 = vmul.f32 1.0, %v279
    %281 = vst [vmem:[#allocation7] sm:$0xff] %v265
    %282 = vst [vmem:[#allocation7 + $0x8] sm:$0xff] %v280
    // Predicated region
    $region46: #{tpu_custom_call.1} parent=1 // pred_check
      _
    $region47: #{tpu_custom_call.1} parent=1 // pred_check_branch
      %284 = sbr.rel (0) target = $region49
    $region48: #{tpu_custom_call.1} parent=1 // pred_region
      %286 = vsyncadd [#allocation4], 0
      %s287 = sshll.u32 [#allocation7], 4
      %s288 = int_to_ptr.vmem [resolvable:$true] %s287
      %s289 = sshll.u32 %s9, 4
      %s290 = int_to_ptr.hbm [resolvable:$true] %s289
      %295 = dma.vmem_to_hbm [thread:$0]  %s288, 256, %s290, [#allocation4], 128, 128, 8
    $region49: #{tpu_custom_call.1} parent=1 // pred_fallthru
      _
    // Predicated region
    $region50: #{tpu_custom_call.1} parent=1 // pred_check
      _
    $region51: #{tpu_custom_call.1} parent=1 // pred_check_branch
      %297 = sbr.rel (0) target = $region53
    $region52: #{tpu_custom_call.1} parent=1 // pred_region
      %299 = dma.done [#allocation4], 256
    $region53: #{tpu_custom_call.1} parent=1 // pred_fallthru
      _
    %300 = vsyncpa [#allocation3], 1
    %301 = vsyncpa [#allocation6], 1
    %302 = vsyncpa [#allocation4], 1

</llo_original>
